<compile_context>
chip_gen: v6e
topology: v6e:2x2x1
jax: 0.10.0
libtpu: 0.0.40
codegen_flags: <defaults>
</compile_context>

<pallas_src>
import jax
import jax.numpy as jnp
from jax.experimental import pallas as pl
from jax.experimental.pallas import tpu as pltpu


def _round_up(x: int, m: int) -> int:
    return ((x + m - 1) // m) * m


def _default_pack_factor() -> int:
    # R rows packed along lanes; K = R*D_in should match the MXU width:
    # v5e MXU is 128 wide -> R=4 (K=128); v6e/v7x are 256 wide -> R=8 (K=256).
    try:
        kind = jax.devices()[0].device_kind.lower()
    except Exception:
        return 8
    if "v5 lite" in kind or "v5lite" in kind or "v5e" in kind:
        return 4
    return 8


def grasp_encoder_kernel(x_ref, w1_ref, b1_ref, w2_ref, b2_ref, out_ref):
    # x_ref:  [T, R*D_in]   (R batch rows packed into the lane dimension)
    # w1_ref: [R*D_in, R*P] block-diagonal bf16
    # w2_ref: [R*P,  R*G]   block-diagonal bf16
    # b1_ref / b2_ref: [1, R*P] / [1, R*G] f32 (bias tiled R times)
    x = x_ref[...].astype(jnp.bfloat16)

    # part_encoder: Linear + ReLU  (bf16 MXU, f32 accumulation)
    part = jnp.dot(x, w1_ref[...], preferred_element_type=jnp.float32)
    part = jnp.maximum(part + b1_ref[...], 0.0)

    # grasp_propagation: Linear + ReLU
    g = jnp.dot(part.astype(jnp.bfloat16), w2_ref[...],
                preferred_element_type=jnp.float32)
    g = jnp.maximum(g + b2_ref[...], 0.0)
    out_ref[...] = g.astype(out_ref.dtype)


def grasp_encoder(grasp, w1, b1, w2, b2, *, pack_rows=None, tile_rows=8192):
    """grasp: [B, D_in], w1: [D_in, P], b1: [P]/[1,P], w2: [P, G], b2: [G]/[1,G]."""
    B, D_in = grasp.shape
    P = w1.shape[-1]
    G = w2.shape[-1]

    r = pack_rows if pack_rows is not None else _default_pack_factor()

    # Pad only to a multiple of R (needed for the packing reshape). No pad to a
    # tile multiple and no trailing slice: the grid handles the ragged last
    # block (OOB output rows are write-masked).
    pad = (-B) % r
    x = grasp if pad == 0 else jnp.pad(grasp, ((0, pad), (0, 0)))
    bp = (B + pad) // r
    xp = x.reshape(bp, r * D_in)              # contiguous reshape -> free

    # Block-diagonal packed weights (built once; constant index_map keeps them
    # VMEM-resident across grid steps). Off-diagonal blocks are exact zeros.
    eye = jnp.eye(r, dtype=jnp.float32)
    w1p = jnp.kron(eye, w1.astype(jnp.float32)).astype(jnp.bfloat16)  # [r*D_in, r*P]
    w2p = jnp.kron(eye, w2.astype(jnp.float32)).astype(jnp.bfloat16)  # [r*P,  r*G]
    b1p = jnp.tile(jnp.reshape(b1, (1, -1)).astype(jnp.float32), (1, r))  # [1, r*P]
    b2p = jnp.tile(jnp.reshape(b2, (1, -1)).astype(jnp.float32), (1, r))  # [1, r*G]

    # Packed-rows tile: big enough to amortize per-step overhead, multiple of
    # 16 sublanes, and no bigger than half the batch so there are >= 2 grid
    # steps (v7x megacore sharding via "parallel").
    tile_p_max = max(16, (tile_rows // r) // 16 * 16)
    tile_p = max(16, min(tile_p_max, _round_up(pl.cdiv(bp, 2), 16)))
    grid = (pl.cdiv(bp, tile_p),)

    cost = pl.CostEstimate(
        flops=2 * B * (D_in * P + P * G),
        transcendentals=0,
        bytes_accessed=int(
            xp.size * xp.dtype.itemsize          # input
            + (B + pad) * G * 2                  # bf16 output
            + w1p.size * 2 + w2p.size * 2        # bf16 packed weights
            + b1p.size * 4 + b2p.size * 4        # f32 packed biases
        ),
    )

    out = pl.pallas_call(
        grasp_encoder_kernel,
        out_shape=jax.ShapeDtypeStruct((bp, r * G), jnp.bfloat16),
        grid_spec=pl.GridSpec(
            grid=grid,
            in_specs=[
                # batch-tiled, lane-dense packed activations
                pl.BlockSpec((tile_p, r * D_in), lambda i: (i, 0)),
                # weights / biases: constant index_map -> DMA'd once
                pl.BlockSpec((r * D_in, r * P), lambda i: (0, 0)),
                pl.BlockSpec((1, r * P), lambda i: (0, 0)),
                pl.BlockSpec((r * P, r * G), lambda i: (0, 0)),
                pl.BlockSpec((1, r * G), lambda i: (0, 0)),
            ],
            out_specs=pl.BlockSpec((tile_p, r * G), lambda i: (i, 0)),
        ),
        compiler_params=pltpu.CompilerParams(
            dimension_semantics=("parallel",),   # independent batch tiles
        ),
        cost_estimate=cost,
    )(xp, w1p, b1p, w2p, b2p)

    out = out.reshape(bp * r, G)                 # free reshape back to rows
    return out if pad == 0 else out[:B]


def reference(grasp, w1, b1, w2, b2):
    part = jnp.maximum(grasp @ w1 + jnp.reshape(b1, (1, -1)), 0.0)
    return jnp.maximum(part @ w2 + jnp.reshape(b2, (1, -1)), 0.0)


if __name__ == "__main__":
    # Small, TPU-friendly shapes consistent with the module's forward.
    B = 200          # batch of grasps
    D_in = 32        # raw grasp feature dim (input to part_encoder)
    P_DIM = 64       # part_encoder_dim
    G_DIM = 32       # grasp_encoder_dim

    key = jax.random.PRNGKey(0)
    k_x, k_w1, k_b1, k_w2, k_b2 = jax.random.split(key, 5)

    # Deterministic parameter init (PyTorch-style uniform ±1/sqrt(fan_in)).
    grasp = jax.random.normal(k_x, (B, D_in), dtype=jnp.float32)
    lim1 = 1.0 / jnp.sqrt(jnp.float32(D_in))
    lim2 = 1.0 / jnp.sqrt(jnp.float32(P_DIM))
    w1 = jax.random.uniform(k_w1, (D_in, P_DIM), jnp.float32, -lim1, lim1)
    b1 = jax.random.uniform(k_b1, (1, P_DIM), jnp.float32, -lim1, lim1)
    w2 = jax.random.uniform(k_w2, (P_DIM, G_DIM), jnp.float32, -lim2, lim2)
    b2 = jax.random.uniform(k_b2, (1, G_DIM), jnp.float32, -lim2, lim2)

    out = grasp_encoder(grasp, w1, b1, w2, b2)
    out = jax.block_until_ready(out)

    ref = reference(grasp, w1, b1, w2, b2)
    assert out.shape == (B, G_DIM)
    # bf16 weights/activations/output -> loosened tolerance vs. f32 reference.
    assert jnp.allclose(out.astype(jnp.float32), ref, atol=5e-2, rtol=5e-2), \
        "mismatch vs reference"

    print("KERNEL_OK")
</pallas_src>

<mosaic_0001>
module attributes {stable_mosaic.version = 11 : i64} {
  func.func @grasp_encoder_kernel(%arg0: i32, %arg1: memref<16x256xf32, #tpu.memory_space<vmem>>, %arg2: memref<256x512xbf16, #tpu.memory_space<vmem>>, %arg3: memref<1x512xf32, #tpu.memory_space<vmem>>, %arg4: memref<512x256xbf16, #tpu.memory_space<vmem>>, %arg5: memref<1x256xf32, #tpu.memory_space<vmem>>, %arg6: memref<16x256xbf16, #tpu.memory_space<vmem>>) attributes {dimension_semantics = [#tpu.dimension_semantics<parallel>], iteration_bounds = array<i64: 2>, scalar_prefetch = 0 : i64, scratch_operands = 0 : i64, tpu.core_type = #tpu.core_type<tc>, window_params = [{transform_indices = @transform_0, window_bounds = array<i64: 16, 256>}, {pipeline_mode = #tpu.pipeline_mode<synchronous>, transform_indices = @transform_1, window_bounds = array<i64: 256, 512>}, {pipeline_mode = #tpu.pipeline_mode<synchronous>, transform_indices = @transform_2, window_bounds = array<i64: 1, 512>}, {pipeline_mode = #tpu.pipeline_mode<synchronous>, transform_indices = @transform_3, window_bounds = array<i64: 512, 256>}, {pipeline_mode = #tpu.pipeline_mode<synchronous>, transform_indices = @transform_4, window_bounds = array<i64: 1, 256>}, {transform_indices = @transform_5, window_bounds = array<i64: 16, 256>}]} {
    %c0 = arith.constant 0 : index
    %c0_0 = arith.constant 0 : index
    %0 = vector.load %arg1[%c0, %c0_0] : memref<16x256xf32, #tpu.memory_space<vmem>>, vector<16x256xf32>
    %1 = arith.truncf %0 : vector<16x256xf32> to vector<16x256xbf16>
    %c0_1 = arith.constant 0 : index
    %c0_2 = arith.constant 0 : index
    %2 = vector.load %arg2[%c0_1, %c0_2] : memref<256x512xbf16, #tpu.memory_space<vmem>>, vector<256x512xbf16>
    %cst = arith.constant dense<0.000000e+00> : vector<16x512xf32>
    %3 = tpu.matmul %1, %2, %cst {dimension_numbers = #tpu.dot_dimension_numbers<[1], [0], [0], [1], [0, 0, 1, 1], [], []>} : vector<16x256xbf16>, vector<256x512xbf16>, vector<16x512xf32> -> vector<16x512xf32>
    %c0_3 = arith.constant 0 : index
    %c0_4 = arith.constant 0 : index
    %4 = vector.load %arg3[%c0_3, %c0_4] : memref<1x512xf32, #tpu.memory_space<vmem>>, vector<1x512xf32>
    %5 = vector.broadcast %4 : vector<1x512xf32> to vector<16x512xf32>
    %6 = arith.addf %3, %5 : vector<16x512xf32>
    %cst_5 = arith.constant 0.000000e+00 : f32
    %7 = vector.broadcast %cst_5 : f32 to vector<16x512xf32>
    %8 = arith.maximumf %6, %7 : vector<16x512xf32>
    %9 = arith.truncf %8 : vector<16x512xf32> to vector<16x512xbf16>
    %c0_6 = arith.constant 0 : index
    %c0_7 = arith.constant 0 : index
    %10 = vector.load %arg4[%c0_6, %c0_7] : memref<512x256xbf16, #tpu.memory_space<vmem>>, vector<512x256xbf16>
    %cst_8 = arith.constant dense<0.000000e+00> : vector<16x256xf32>
    %11 = tpu.matmul %9, %10, %cst_8 {dimension_numbers = #tpu.dot_dimension_numbers<[1], [0], [0], [1], [0, 0, 1, 1], [], []>} : vector<16x512xbf16>, vector<512x256xbf16>, vector<16x256xf32> -> vector<16x256xf32>
    %c0_9 = arith.constant 0 : index
    %c0_10 = arith.constant 0 : index
    %12 = vector.load %arg5[%c0_9, %c0_10] : memref<1x256xf32, #tpu.memory_space<vmem>>, vector<1x256xf32>
    %13 = vector.broadcast %12 : vector<1x256xf32> to vector<16x256xf32>
    %14 = arith.addf %11, %13 : vector<16x256xf32>
    %cst_11 = arith.constant 0.000000e+00 : f32
    %15 = vector.broadcast %cst_11 : f32 to vector<16x256xf32>
    %16 = arith.maximumf %14, %15 : vector<16x256xf32>
    %17 = arith.truncf %16 : vector<16x256xf32> to vector<16x256xbf16>
    %c0_12 = arith.constant 0 : index
    %c0_13 = arith.constant 0 : index
    %18 = vector.load %arg6[%c0_12, %c0_13] : memref<16x256xbf16, #tpu.memory_space<vmem>>, vector<16x256xbf16>
    tpu.vector_store %arg6[%c0_12, %c0_13], %17 {strides = array<i32>} : memref<16x256xbf16, #tpu.memory_space<vmem>>, vector<16x256xbf16>,
    return
  }
  func.func @transform_0(%arg0: i32) -> (i32, i32) {
    %c0_i32 = arith.constant 0 : i32
    %c0_i32_0 = arith.constant 0 : i32
    return %arg0, %c0_i32 : i32, i32
  }
  func.func @transform_1(%arg0: i32) -> (i32, i32) {
    %c0_i32 = arith.constant 0 : i32
    %c0_i32_0 = arith.constant 0 : i32
    %c0_i32_1 = arith.constant 0 : i32
    return %c0_i32, %c0_i32_0 : i32, i32
  }
  func.func @transform_2(%arg0: i32) -> (i32, i32) {
    %c0_i32 = arith.constant 0 : i32
    %c0_i32_0 = arith.constant 0 : i32
    %c0_i32_1 = arith.constant 0 : i32
    return %c0_i32, %c0_i32_0 : i32, i32
  }
  func.func @transform_3(%arg0: i32) -> (i32, i32) {
    %c0_i32 = arith.constant 0 : i32
    %c0_i32_0 = arith.constant 0 : i32
    %c0_i32_1 = arith.constant 0 : i32
    return %c0_i32, %c0_i32_0 : i32, i32
  }
  func.func @transform_4(%arg0: i32) -> (i32, i32) {
    %c0_i32 = arith.constant 0 : i32
    %c0_i32_0 = arith.constant 0 : i32
    %c0_i32_1 = arith.constant 0 : i32
    return %c0_i32, %c0_i32_0 : i32, i32
  }
  func.func @transform_5(%arg0: i32) -> (i32, i32) {
    %c0_i32 = arith.constant 0 : i32
    %c0_i32_0 = arith.constant 0 : i32
    return %arg0, %c0_i32 : i32, i32
  }
}

</mosaic_0001>

<llo_original>
// kernel: tpu_custom_call.1
$region0: #{tpu_custom_call.1}
  #allocation0 [shape = 'u32[]', space=smem, size = 0x4, offset = 0x4, fixed_abs, tag = 'smem constant byte address 0x4 - core index']
  #allocation1 [shape = 'u32[144,128]{1,0:T(1,128)}', space=vmem, size = 0x12000, scoped, tag = 'internal scratch']
  %s0 = inlined_call_operand.hbm [shape: f32[25,256], index: 0, kind: input, shape index: {}]
  %s1 = inlined_call_operand.hbm [shape: bf16[256,512], index: 1, kind: input, shape index: {}]
  %s2 = inlined_call_operand.hbm [shape: f32[1,512], index: 2, kind: input, shape index: {}]
  %s3 = inlined_call_operand.hbm [shape: bf16[512,256], index: 3, kind: input, shape index: {}]
  %s4 = inlined_call_operand.vmem [shape: f32[1,256], index: 4, kind: input, shape index: {}]
  %s5 = inlined_call_operand.hbm [shape: bf16[25,256], index: 5, kind: output, shape index: {}]
  %s6 = sld [smem:[#allocation0]]
  $region69: #{tpu_custom_call.1} parent=0
    _
  %s8 = ssub.s32 1, %s6
  %s9 = scalar_select 0, %s8, %s6
  $region1: #{tpu_custom_call.1} parent=0
    #allocation2 [shape = 'u8[32768]{0}', space=vmem, size = 0x8000, scoped, tag = 'input window, operand 0']
    #allocation3 [shape = 's32[2]{0}', space=sflag, size = 0x8, scoped, tag = 'scoped memory for tpu_custom_call.1']
    #allocation4 [shape = 's32[2]{0}', space=sflag, size = 0x8, scoped, tag = 'scoped memory for tpu_custom_call.1']
    #allocation5 [shape = 'u8[262144]{0}', space=vmem, size = 0x40000, scoped, tag = 'input window, operand 1, single buffered']
    #allocation6 [shape = 's32[1]{0}', space=sflag, size = 0x4, scoped, tag = 'scoped memory for tpu_custom_call.1']
    #allocation7 [shape = 'u8[2048]{0}', space=vmem, size = 0x800, scoped, tag = 'input window, operand 2, single buffered']
    #allocation8 [shape = 'u8[262144]{0}', space=vmem, size = 0x40000, scoped, tag = 'input window, operand 3, single buffered']
    #allocation9 [shape = 's32[1]{0}', space=sflag, size = 0x4, scoped, tag = 'scoped memory for tpu_custom_call.1']
    #allocation10 [shape = 'u8[16384]{0}', space=vmem, size = 0x4000, scoped, tag = 'output window, operand 0']
    %10 = vsyncpa [#allocation3], 0
    %s11 = scalar_lea.sflag [#allocation3], 1
    %12 = vsyncpa %s11, 0
    %13 = vsyncpa [#allocation6], 0
    %14 = vsyncpa [#allocation9], 0
    %15 = vsyncpa [#allocation4], 0
    %s16 = scalar_lea.sflag [#allocation4], 1
    %17 = vsyncpa %s16, 0
    loop: start=0, step=1, limit=4
    $region2: #{tpu_custom_call.1} parent=1 // loop_pre_header
      _
    $region3: #{tpu_custom_call.1} parent=1 // loop_header
      %s19 = sphi 0, %s23
      %p20 = scmp.ge.s32.totalorder %s19, 4
      %s29 = sphi 0, %s31
      %s32 = sphi 0, %s29
      %s33 = sphi 0, %s32
      %s49 = sphi 0, %s33
      %s53 = sphi 0, %s53
      %s55 = sphi 0, %s53
      %s56 = sphi 0, %s55
      %s70 = sphi 0, %s56
      %s74 = sphi 0, %s74
      %s76 = sphi 0, %s74
      %s77 = sphi 0, %s76
      %s91 = sphi 0, %s77
      %s95 = sphi 0, %s95
      %s97 = sphi 0, %s95
      %s98 = sphi 0, %s97
      %s112 = sphi 0, %s98
      %s116 = sphi 0, %s116
      %s118 = sphi 0, %s116
      %s119 = sphi 0, %s118
      %s133 = sphi 0, %s119
      %s139 = sphi 0, %s141
      %s142 = sphi 0, %s139
      %s143 = sphi 0, %s142
      %s159 = sphi 0, %s143
    $region4: #{tpu_custom_call.1} parent=1 // loop_header_branch
      %22 = sbr.rel (%p20) target = $region8
    $region5: #{tpu_custom_call.1} parent=1 // loop_body
      %s24 = ssub.s32 %s19, 1
      %s25 = ssub.s32 %s19, 2
      %s26 = sadd.s32 %s19, 1
      %s27 = ssub.s32 %s19, %s26
      %p28 = scmp.eq.s32.totalorder %s27, 0
      %s30 = sadd.s32 %s29, 1
      %s31 = scalar_select %p28, %s29, %s30
      %p34 = pneg %p28
      %p35 = scmp.eq.s32.totalorder %s19, 1
      %p36 = por %p34, %p35
      %p37 = scmp.ne.s32.totalorder %s29, %s32
      %p38 = scmp.eq.s32.totalorder %s19, 0
      %p39 = por %p37, %p38
      %p40 = scmp.ne.s32.totalorder %s29, %s32
      %p41 = scmp.eq.s32.totalorder %s24, 1
      %p42 = por %p40, %p41
      %p43 = scmp.ne.s32.totalorder %s32, %s33
      %p44 = scmp.eq.s32.totalorder %s24, 0
      %p45 = por %p43, %p44
      %p46 = scmp.ne.s32.totalorder %s32, %s33
      %p47 = scmp.eq.s32.totalorder %s25, 1
      %p48 = por %p46, %p47
      %p50 = scmp.ne.s32.totalorder %s33, %s49
      %p51 = scmp.eq.s32.totalorder %s25, 0
      %p52 = por %p50, %p51
      %s54 = sadd.s32 %s53, 1
      %p57 = scmp.eq.s32.totalorder %s19, 1
      %p58 = scmp.ne.s32.totalorder %s53, %s55
      %p59 = scmp.eq.s32.totalorder %s19, 0
      %p60 = por %p58, %p59
      %p61 = scmp.ne.s32.totalorder %s53, %s55
      %p62 = scmp.eq.s32.totalorder %s24, 1
      %p63 = por %p61, %p62
      %p64 = scmp.ne.s32.totalorder %s55, %s56
      %p65 = scmp.eq.s32.totalorder %s24, 0
      %p66 = por %p64, %p65
      %p67 = scmp.ne.s32.totalorder %s55, %s56
      %p68 = scmp.eq.s32.totalorder %s25, 1
      %p69 = por %p67, %p68
      %p71 = scmp.ne.s32.totalorder %s56, %s70
      %p72 = scmp.eq.s32.totalorder %s25, 0
      %p73 = por %p71, %p72
      %s75 = sadd.s32 %s74, 1
      %p78 = scmp.eq.s32.totalorder %s19, 1
      %p79 = scmp.ne.s32.totalorder %s74, %s76
      %p80 = scmp.eq.s32.totalorder %s19, 0
      %p81 = por %p79, %p80
      %p82 = scmp.ne.s32.totalorder %s74, %s76
      %p83 = scmp.eq.s32.totalorder %s24, 1
      %p84 = por %p82, %p83
      %p85 = scmp.ne.s32.totalorder %s76, %s77
      %p86 = scmp.eq.s32.totalorder %s24, 0
      %p87 = por %p85, %p86
      %p88 = scmp.ne.s32.totalorder %s76, %s77
      %p89 = scmp.eq.s32.totalorder %s25, 1
      %p90 = por %p88, %p89
      %p92 = scmp.ne.s32.totalorder %s77, %s91
      %p93 = scmp.eq.s32.totalorder %s25, 0
      %p94 = por %p92, %p93
      %s96 = sadd.s32 %s95, 1
      %p99 = scmp.eq.s32.totalorder %s19, 1
      %p100 = scmp.ne.s32.totalorder %s95, %s97
      %p101 = scmp.eq.s32.totalorder %s19, 0
      %p102 = por %p100, %p101
      %p103 = scmp.ne.s32.totalorder %s95, %s97
      %p104 = scmp.eq.s32.totalorder %s24, 1
      %p105 = por %p103, %p104
      %p106 = scmp.ne.s32.totalorder %s97, %s98
      %p107 = scmp.eq.s32.totalorder %s24, 0
      %p108 = por %p106, %p107
      %p109 = scmp.ne.s32.totalorder %s97, %s98
      %p110 = scmp.eq.s32.totalorder %s25, 1
      %p111 = por %p109, %p110
      %p113 = scmp.ne.s32.totalorder %s98, %s112
      %p114 = scmp.eq.s32.totalorder %s25, 0
      %p115 = por %p113, %p114
      %s117 = sadd.s32 %s116, 1
      %p120 = scmp.eq.s32.totalorder %s19, 1
      %p121 = scmp.ne.s32.totalorder %s116, %s118
      %p122 = scmp.eq.s32.totalorder %s19, 0
      %p123 = por %p121, %p122
      %p124 = scmp.ne.s32.totalorder %s116, %s118
      %p125 = scmp.eq.s32.totalorder %s24, 1
      %p126 = por %p124, %p125
      %p127 = scmp.ne.s32.totalorder %s118, %s119
      %p128 = scmp.eq.s32.totalorder %s24, 0
      %p129 = por %p127, %p128
      %p130 = scmp.ne.s32.totalorder %s118, %s119
      %p131 = scmp.eq.s32.totalorder %s25, 1
      %p132 = por %p130, %p131
      %p134 = scmp.ne.s32.totalorder %s119, %s133
      %p135 = scmp.eq.s32.totalorder %s25, 0
      %p136 = por %p134, %p135
      %s137 = ssub.s32 %s19, %s26
      %p138 = scmp.eq.s32.totalorder %s137, 0
      %s140 = sadd.s32 %s139, 1
      %s141 = scalar_select %p138, %s139, %s140
      %p144 = pneg %p138
      %p145 = scmp.eq.s32.totalorder %s19, 1
      %p146 = por %p144, %p145
      %p147 = scmp.ne.s32.totalorder %s139, %s142
      %p148 = scmp.eq.s32.totalorder %s19, 0
      %p149 = por %p147, %p148
      %p150 = scmp.ne.s32.totalorder %s139, %s142
      %p151 = scmp.eq.s32.totalorder %s24, 1
      %p152 = por %p150, %p151
      %p153 = scmp.ne.s32.totalorder %s142, %s143
      %p154 = scmp.eq.s32.totalorder %s24, 0
      %p155 = por %p153, %p154
      %p156 = scmp.ne.s32.totalorder %s142, %s143
      %p157 = scmp.eq.s32.totalorder %s25, 1
      %p158 = por %p156, %p157
      %p160 = scmp.ne.s32.totalorder %s143, %s159
      %p161 = scmp.eq.s32.totalorder %s25, 0
      %p162 = por %p160, %p161
      %p163 = scmp.le.s32.totalorder 1, %s19
      %p164 = scmp.lt.s32.totalorder %s19, 3
      %p165 = pnand %p163, %p164
      %p166 = pneg %p165
      // Predicated region
      $region9: #{tpu_custom_call.1} parent=5 // pred_check
        _
      $region10: #{tpu_custom_call.1} parent=5 // pred_check_branch
        %168 = sbr.rel (%p165) target = $region12
      $region11: #{tpu_custom_call.1} parent=5 // pred_region
        %s169 = ssub.s32 %s19, 1
        // Predicated region
        $region13: #{tpu_custom_call.1} parent=11 // pred_check
          %p170 = pneg %p66
        $region14: #{tpu_custom_call.1} parent=11 // pred_check_branch
          %172 = sbr.rel (%p170) target = $region16
        $region15: #{tpu_custom_call.1} parent=11 // pred_region
          %s174 = ssub.s32 8192, 8192
          %175 = vsyncadd [#allocation6], %s174
          %s176 = sshll.u32 [#allocation5], 4
          %s177 = int_to_ptr.vmem [resolvable:$true] %s176
          %182 = dma.hbm_to_vmem [thread:$0]  %s1, 8192, %s177, [#allocation6], 256, 256, 16
        $region16: #{tpu_custom_call.1} parent=11 // pred_fallthru
          _
        // Predicated region
        $region17: #{tpu_custom_call.1} parent=11 // pred_check
          %p183 = pneg %p87
        $region18: #{tpu_custom_call.1} parent=11 // pred_check_branch
          %185 = sbr.rel (%p183) target = $region20
        $region19: #{tpu_custom_call.1} parent=11 // pred_region
          %s187 = ssub.s32 64, 64
          %188 = vsyncadd [#allocation6], %s187
          %s190 = sshll.u32 [#allocation7], 4
          %s191 = int_to_ptr.vmem [resolvable:$true] %s190
          %193 = dma.hbm_to_vmem [thread:$0]  %s2, 64, %s191, [#allocation6]
        $region20: #{tpu_custom_call.1} parent=11 // pred_fallthru
          _
        // Predicated region
        $region21: #{tpu_custom_call.1} parent=11 // pred_check
          %p194 = pneg %p108
        $region22: #{tpu_custom_call.1} parent=11 // pred_check_branch
          %196 = sbr.rel (%p194) target = $region24
        $region23: #{tpu_custom_call.1} parent=11 // pred_region
          %s198 = ssub.s32 8192, 8192
          %199 = vsyncadd [#allocation9], %s198
          %s200 = sshll.u32 [#allocation8], 4
          %s201 = int_to_ptr.vmem [resolvable:$true] %s200
          %206 = dma.hbm_to_vmem [thread:$0]  %s3, 8192, %s201, [#allocation9], 128, 128, 8
        $region24: #{tpu_custom_call.1} parent=11 // pred_fallthru
          _
        // Predicated region
        $region25: #{tpu_custom_call.1} parent=11 // pred_check
          %p207 = pneg %p129
        $region26: #{tpu_custom_call.1} parent=11 // pred_check_branch
          %209 = sbr.rel (%p207) target = $region28
        $region27: #{tpu_custom_call.1} parent=11 // pred_region
          _
        $region28: #{tpu_custom_call.1} parent=11 // pred_fallthru
          _
      $region12: #{tpu_custom_call.1} parent=5 // pred_fallthru
        _
      %p210 = scmp.lt.s32.totalorder %s19, 2
      // Predicated region
      $region29: #{tpu_custom_call.1} parent=5 // pred_check
        %p211 = pneg %p210
      $region30: #{tpu_custom_call.1} parent=5 // pred_check_branch
        %213 = sbr.rel (%p211) target = $region32
      $region31: #{tpu_custom_call.1} parent=5 // pred_region
        // Predicated region
        $region33: #{tpu_custom_call.1} parent=31 // pred_check
          %p214 = pneg %p39
        $region34: #{tpu_custom_call.1} parent=31 // pred_check_branch
          %216 = sbr.rel (%p214) target = $region36
        $region35: #{tpu_custom_call.1} parent=31 // pred_region
          %s217 = sand.u32 %s29, 1
          %s218 = scalar_lea.sflag [#allocation3], %s217
          %s219 = sand.u32 %s29, 1
          %s220 = smul.addr %s219, 32
          %s221 = scalar_lea.vmem [#allocation2], %s220
          %s222 = smul.u32 2, %s19
          %s224 = ssub.s32 512, 512
          %225 = vsyncadd %s218, %s224
          %s226 = smul.addr %s222, 2
          %s227 = smul.addr %s226, 128
          %s228 = scalar_lea.hbm %s0, %s227
          %s229 = sshll.u32 %s221, 4
          %s230 = int_to_ptr.vmem [resolvable:$true] %s229
          %235 = dma.hbm_to_vmem [thread:$0]  %s228, 512, %s230, %s218, 256, 256, 16
        $region36: #{tpu_custom_call.1} parent=31 // pred_fallthru
          _
      $region32: #{tpu_custom_call.1} parent=5 // pred_fallthru
        _
      %p236 = scmp.le.s32.totalorder 1, %s19
      %p237 = scmp.lt.s32.totalorder %s19, 3
      %p238 = pnand %p236, %p237
      %p239 = pneg %p238
      // Predicated region
      $region37: #{tpu_custom_call.1} parent=5 // pred_check
        _
      $region38: #{tpu_custom_call.1} parent=5 // pred_check_branch
        %241 = sbr.rel (%p238) target = $region40
      $region39: #{tpu_custom_call.1} parent=5 // pred_region
        %s242 = ssub.s32 %s19, 1
        %s243 = sand.u32 %s32, 1
        %s244 = scalar_lea.sflag [#allocation3], %s243
        %s245 = sand.u32 %s32, 1
        %s246 = smul.addr %s245, 32
        %s247 = scalar_lea.vmem [#allocation2], %s246
        // Predicated region
        $region41: #{tpu_custom_call.1} parent=39 // pred_check
          %p248 = pneg %p45
        $region42: #{tpu_custom_call.1} parent=39 // pred_check_branch
          %250 = sbr.rel (%p248) target = $region44
        $region43: #{tpu_custom_call.1} parent=39 // pred_region
          %251 = dma.done %s244, 512
        $region44: #{tpu_custom_call.1} parent=39 // pred_fallthru
          _
        // Predicated region
        $region45: #{tpu_custom_call.1} parent=39 // pred_check
          %p252 = pneg %p66
        $region46: #{tpu_custom_call.1} parent=39 // pred_check_branch
          %254 = sbr.rel (%p252) target = $region48
        $region47: #{tpu_custom_call.1} parent=39 // pred_region
          %255 = dma.done [#allocation6], 8192
        $region48: #{tpu_custom_call.1} parent=39 // pred_fallthru
          _
        // Predicated region
        $region49: #{tpu_custom_call.1} parent=39 // pred_check
          %p256 = pneg %p87
        $region50: #{tpu_custom_call.1} parent=39 // pred_check_branch
          %258 = sbr.rel (%p256) target = $region52
        $region51: #{tpu_custom_call.1} parent=39 // pred_region
          %259 = dma.done [#allocation6], 64
        $region52: #{tpu_custom_call.1} parent=39 // pred_fallthru
          _
        // Predicated region
        $region53: #{tpu_custom_call.1} parent=39 // pred_check
          %p260 = pneg %p108
        $region54: #{tpu_custom_call.1} parent=39 // pred_check_branch
          %262 = sbr.rel (%p260) target = $region56
        $region55: #{tpu_custom_call.1} parent=39 // pred_region
          %263 = dma.done [#allocation9], 8192
        $region56: #{tpu_custom_call.1} parent=39 // pred_fallthru
          _
        %s264 = sand.u32 %s32, 1
        %s265 = scalar_lea.sflag [#allocation3], %s264
        %s266 = sand.u32 %s32, 1
        %s267 = smul.addr %s266, 32
        %s268 = scalar_lea.vmem [#allocation2], %s267
        %p269 = pneg %p45
        %p270 = pneg %p42
        %p271 = pneg %p66
        %p272 = pneg %p63
        %p273 = pneg %p87
        %p274 = pneg %p84
        %p275 = pneg %p108
        %p276 = pneg %p105
        %p277 = pneg %p129
        %p278 = pneg %p126
        %p279 = pneg %p155
        %p280 = pneg %p152
        %s281 = sand.u32 %s142, 1
        %s282 = scalar_lea.sflag [#allocation4], %s281
        %s283 = sand.u32 %s142, 1
        %s284 = smul.addr %s283, 16
        %s285 = scalar_lea.vmem [#allocation10], %s284
        %s286 = smul.u32 2, %s24
        %s287 = smul.u32 2, %s24
        %v288 = vld [vmem:[%s247] sm:$0xff]
        %v289 = vld [vmem:[%s247 + $0x8] sm:$0xff]
        %v290 = vld [vmem:[%s247 + $0x10] sm:$0xff]
        %v291 = vld [vmem:[%s247 + $0x18] sm:$0xff]
        %v292 = vpack.c.bf16 %v290, %v288
        %v293 = vpack.c.bf16 %v291, %v289
        %v294 = vld [vmem:[#allocation5] sm:$0xff]
        %v295 = vld [vmem:[#allocation5 + $0x8] sm:$0xff]
        %v296 = vld [vmem:[#allocation5 + $0x10] sm:$0xff]
        %v297 = vld [vmem:[#allocation5 + $0x18] sm:$0xff]
        %v298 = vld [vmem:[#allocation5 + $0x20] sm:$0xff]
        %v299 = vld [vmem:[#allocation5 + $0x28] sm:$0xff]
        %v300 = vld [vmem:[#allocation5 + $0x30] sm:$0xff]
        %v301 = vld [vmem:[#allocation5 + $0x38] sm:$0xff]
        %v302 = vld [vmem:[#allocation5 + $0x40] sm:$0xff]
        %v303 = vld [vmem:[#allocation5 + $0x48] sm:$0xff]
        %v304 = vld [vmem:[#allocation5 + $0x50] sm:$0xff]
        %v305 = vld [vmem:[#allocation5 + $0x58] sm:$0xff]
        %v306 = vld [vmem:[#allocation5 + $0x60] sm:$0xff]
        %v307 = vld [vmem:[#allocation5 + $0x68] sm:$0xff]
        %v308 = vld [vmem:[#allocation5 + $0x70] sm:$0xff]
        %v309 = vld [vmem:[#allocation5 + $0x78] sm:$0xff]
        %v310 = vld [vmem:[#allocation5 + $0x80] sm:$0xff]
        %v311 = vld [vmem:[#allocation5 + $0x88] sm:$0xff]
        %v312 = vld [vmem:[#allocation5 + $0x90] sm:$0xff]
        %v313 = vld [vmem:[#allocation5 + $0x98] sm:$0xff]
        %v314 = vld [vmem:[#allocation5 + $0xa0] sm:$0xff]
        %v315 = vld [vmem:[#allocation5 + $0xa8] sm:$0xff]
        %v316 = vld [vmem:[#allocation5 + $0xb0] sm:$0xff]
        %v317 = vld [vmem:[#allocation5 + $0xb8] sm:$0xff]
        %v318 = vld [vmem:[#allocation5 + $0xc0] sm:$0xff]
        %v319 = vld [vmem:[#allocation5 + $0xc8] sm:$0xff]
        %v320 = vld [vmem:[#allocation5 + $0xd0] sm:$0xff]
        %v321 = vld [vmem:[#allocation5 + $0xd8] sm:$0xff]
        %v322 = vld [vmem:[#allocation5 + $0xe0] sm:$0xff]
        %v323 = vld [vmem:[#allocation5 + $0xe8] sm:$0xff]
        %v324 = vld [vmem:[#allocation5 + $0xf0] sm:$0xff]
        %v325 = vld [vmem:[#allocation5 + $0xf8] sm:$0xff]
        %v326 = vld [vmem:[#allocation5 + $0x100] sm:$0xff]
        %v327 = vld [vmem:[#allocation5 + $0x108] sm:$0xff]
        %v328 = vld [vmem:[#allocation5 + $0x110] sm:$0xff]
        %v329 = vld [vmem:[#allocation5 + $0x118] sm:$0xff]
        %v330 = vld [vmem:[#allocation5 + $0x120] sm:$0xff]
        %v331 = vld [vmem:[#allocation5 + $0x128] sm:$0xff]
        %v332 = vld [vmem:[#allocation5 + $0x130] sm:$0xff]
        %v333 = vld [vmem:[#allocation5 + $0x138] sm:$0xff]
        %v334 = vld [vmem:[#allocation5 + $0x140] sm:$0xff]
        %v335 = vld [vmem:[#allocation5 + $0x148] sm:$0xff]
        %v336 = vld [vmem:[#allocation5 + $0x150] sm:$0xff]
        %v337 = vld [vmem:[#allocation5 + $0x158] sm:$0xff]
        %v338 = vld [vmem:[#allocation5 + $0x160] sm:$0xff]
        %v339 = vld [vmem:[#allocation5 + $0x168] sm:$0xff]
        %v340 = vld [vmem:[#allocation5 + $0x170] sm:$0xff]
        %v341 = vld [vmem:[#allocation5 + $0x178] sm:$0xff]
        %v342 = vld [vmem:[#allocation5 + $0x180] sm:$0xff]
        %v343 = vld [vmem:[#allocation5 + $0x188] sm:$0xff]
        %v344 = vld [vmem:[#allocation5 + $0x190] sm:$0xff]
        %v345 = vld [vmem:[#allocation5 + $0x198] sm:$0xff]
        %v346 = vld [vmem:[#allocation5 + $0x1a0] sm:$0xff]
        %v347 = vld [vmem:[#allocation5 + $0x1a8] sm:$0xff]
        %v348 = vld [vmem:[#allocation5 + $0x1b0] sm:$0xff]
        %v349 = vld [vmem:[#allocation5 + $0x1b8] sm:$0xff]
        %v350 = vld [vmem:[#allocation5 + $0x1c0] sm:$0xff]
        %v351 = vld [vmem:[#allocation5 + $0x1c8] sm:$0xff]
        %v352 = vld [vmem:[#allocation5 + $0x1d0] sm:$0xff]
        %v353 = vld [vmem:[#allocation5 + $0x1d8] sm:$0xff]
        %v354 = vld [vmem:[#allocation5 + $0x1e0] sm:$0xff]
        %v355 = vld [vmem:[#allocation5 + $0x1e8] sm:$0xff]
        %v356 = vld [vmem:[#allocation5 + $0x1f0] sm:$0xff]
        %v357 = vld [vmem:[#allocation5 + $0x1f8] sm:$0xff]
        %v358 = vld [vmem:[#allocation7] sm:$0xf]
        %v360 = vlaneseq
        %v361 = vshrl.u32 %v360, 7
        %v362 = vsub.s32 0, %v361
        %v363 = vrot.slane %v358, %v362
        %v364 = vlaneseq
        %v365 = vshrl.u32 %v364, 7
        %v366 = vsub.s32 1, %v365
        %v367 = vrot.slane %v358, %v366
        %v368 = vlaneseq
        %v369 = vshrl.u32 %v368, 7
        %v370 = vsub.s32 2, %v369
        %v371 = vrot.slane %v358, %v370
        %v372 = vlaneseq
        %v373 = vshrl.u32 %v372, 7
        %v374 = vsub.s32 3, %v373
        %v375 = vrot.slane %v358, %v374
        %v444 = vunpack.c.l.b16 %v294
        %v445 = vunpack.c.h.b16 %v294
        %v446 = vunpack.c.l.b16 %v295
        %v447 = vunpack.c.h.b16 %v295
        %v448 = vunpack.c.l.b16 %v296
        %v449 = vunpack.c.h.b16 %v296
        %v450 = vunpack.c.l.b16 %v297
        %v451 = vunpack.c.h.b16 %v297
        %v452 = vunpack.c.l.b16 %v298
        %v453 = vunpack.c.h.b16 %v298
        %v454 = vunpack.c.l.b16 %v299
        %v455 = vunpack.c.h.b16 %v299
        %v456 = vunpack.c.l.b16 %v300
        %v457 = vunpack.c.h.b16 %v300
        %v458 = vunpack.c.l.b16 %v301
        %v459 = vunpack.c.h.b16 %v301
        %v460 = vunpack.c.l.b16 %v302
        %v461 = vunpack.c.h.b16 %v302
        %v462 = vunpack.c.l.b16 %v303
        %v463 = vunpack.c.h.b16 %v303
        %v464 = vunpack.c.l.b16 %v304
        %v465 = vunpack.c.h.b16 %v304
        %v466 = vunpack.c.l.b16 %v305
        %v467 = vunpack.c.h.b16 %v305
        %v468 = vunpack.c.l.b16 %v306
        %v469 = vunpack.c.h.b16 %v306
        %v470 = vunpack.c.l.b16 %v307
        %v471 = vunpack.c.h.b16 %v307
        %v472 = vunpack.c.l.b16 %v308
        %v473 = vunpack.c.h.b16 %v308
        %v474 = vunpack.c.l.b16 %v309
        %v475 = vunpack.c.h.b16 %v309
        %v476 = vunpack.c.l.b16 %v310
        %v477 = vunpack.c.h.b16 %v310
        %v478 = vunpack.c.l.b16 %v311
        %v479 = vunpack.c.h.b16 %v311
        %v480 = vunpack.c.l.b16 %v312
        %v481 = vunpack.c.h.b16 %v312
        %v482 = vunpack.c.l.b16 %v313
        %v483 = vunpack.c.h.b16 %v313
        %v484 = vunpack.c.l.b16 %v314
        %v485 = vunpack.c.h.b16 %v314
        %v486 = vunpack.c.l.b16 %v315
        %v487 = vunpack.c.h.b16 %v315
        %v488 = vunpack.c.l.b16 %v316
        %v489 = vunpack.c.h.b16 %v316
        %v490 = vunpack.c.l.b16 %v317
        %v491 = vunpack.c.h.b16 %v317
        %v492 = vunpack.c.l.b16 %v318
        %v493 = vunpack.c.h.b16 %v318
        %v494 = vunpack.c.l.b16 %v319
        %v495 = vunpack.c.h.b16 %v319
        %v496 = vunpack.c.l.b16 %v320
        %v497 = vunpack.c.h.b16 %v320
        %v498 = vunpack.c.l.b16 %v321
        %v499 = vunpack.c.h.b16 %v321
        %v500 = vunpack.c.l.b16 %v322
        %v501 = vunpack.c.h.b16 %v322
        %v502 = vunpack.c.l.b16 %v323
        %v503 = vunpack.c.h.b16 %v323
        %v504 = vunpack.c.l.b16 %v324
        %v505 = vunpack.c.h.b16 %v324
        %v506 = vunpack.c.l.b16 %v325
        %v507 = vunpack.c.h.b16 %v325
        %v508 = vunpack.c.l.b16 %v326
        %v509 = vunpack.c.h.b16 %v326
        %v510 = vunpack.c.l.b16 %v327
        %v511 = vunpack.c.h.b16 %v327
        %v512 = vunpack.c.l.b16 %v328
        %v513 = vunpack.c.h.b16 %v328
        %v514 = vunpack.c.l.b16 %v329
        %v515 = vunpack.c.h.b16 %v329
        %v516 = vunpack.c.l.b16 %v330
        %v517 = vunpack.c.h.b16 %v330
        %v518 = vunpack.c.l.b16 %v331
        %v519 = vunpack.c.h.b16 %v331
        %v520 = vunpack.c.l.b16 %v332
        %v521 = vunpack.c.h.b16 %v332
        %v522 = vunpack.c.l.b16 %v333
        %v523 = vunpack.c.h.b16 %v333
        %v524 = vunpack.c.l.b16 %v334
        %v525 = vunpack.c.h.b16 %v334
        %v526 = vunpack.c.l.b16 %v335
        %v527 = vunpack.c.h.b16 %v335
        %v528 = vunpack.c.l.b16 %v336
        %v529 = vunpack.c.h.b16 %v336
        %v530 = vunpack.c.l.b16 %v337
        %v531 = vunpack.c.h.b16 %v337
        %v532 = vunpack.c.l.b16 %v338
        %v533 = vunpack.c.h.b16 %v338
        %v534 = vunpack.c.l.b16 %v339
        %v535 = vunpack.c.h.b16 %v339
        %v536 = vunpack.c.l.b16 %v340
        %v537 = vunpack.c.h.b16 %v340
        %v538 = vunpack.c.l.b16 %v341
        %v539 = vunpack.c.h.b16 %v341
        %v540 = vunpack.c.l.b16 %v342
        %v541 = vunpack.c.h.b16 %v342
        %v542 = vunpack.c.l.b16 %v343
        %v543 = vunpack.c.h.b16 %v343
        %v544 = vunpack.c.l.b16 %v344
        %v545 = vunpack.c.h.b16 %v344
        %v546 = vunpack.c.l.b16 %v345
        %v547 = vunpack.c.h.b16 %v345
        %v548 = vunpack.c.l.b16 %v346
        %v549 = vunpack.c.h.b16 %v346
        %v550 = vunpack.c.l.b16 %v347
        %v551 = vunpack.c.h.b16 %v347
        %v552 = vunpack.c.l.b16 %v348
        %v553 = vunpack.c.h.b16 %v348
        %v554 = vunpack.c.l.b16 %v349
        %v555 = vunpack.c.h.b16 %v349
        %v556 = vunpack.c.l.b16 %v350
        %v557 = vunpack.c.h.b16 %v350
        %v558 = vunpack.c.l.b16 %v351
        %v559 = vunpack.c.h.b16 %v351
        %v560 = vunpack.c.l.b16 %v352
        %v561 = vunpack.c.h.b16 %v352
        %v562 = vunpack.c.l.b16 %v353
        %v563 = vunpack.c.h.b16 %v353
        %v564 = vunpack.c.l.b16 %v354
        %v565 = vunpack.c.h.b16 %v354
        %v566 = vunpack.c.l.b16 %v355
        %v567 = vunpack.c.h.b16 %v355
        %v568 = vunpack.c.l.b16 %v356
        %v569 = vunpack.c.h.b16 %v356
        %v570 = vunpack.c.l.b16 %v357
        %v571 = vunpack.c.h.b16 %v357
        %v572 = vpack.c.b16 %v448, %v444
        %v573 = vpack.c.b16 %v449, %v445
        %v574 = vpack.c.b16 %v450, %v446
        %v575 = vpack.c.b16 %v451, %v447
        %v576 = vpack.c.b16 %v456, %v452
        %v577 = vpack.c.b16 %v457, %v453
        %v578 = vpack.c.b16 %v458, %v454
        %v579 = vpack.c.b16 %v459, %v455
        %v580 = vpack.c.b16 %v464, %v460
        %v581 = vpack.c.b16 %v465, %v461
        %v582 = vpack.c.b16 %v466, %v462
        %v583 = vpack.c.b16 %v467, %v463
        %v584 = vpack.c.b16 %v472, %v468
        %v585 = vpack.c.b16 %v473, %v469
        %v586 = vpack.c.b16 %v474, %v470
        %v587 = vpack.c.b16 %v475, %v471
        %v588 = vpack.c.b16 %v480, %v476
        %v589 = vpack.c.b16 %v481, %v477
        %v590 = vpack.c.b16 %v482, %v478
        %v591 = vpack.c.b16 %v483, %v479
        %v592 = vpack.c.b16 %v488, %v484
        %v593 = vpack.c.b16 %v489, %v485
        %v594 = vpack.c.b16 %v490, %v486
        %v595 = vpack.c.b16 %v491, %v487
        %v596 = vpack.c.b16 %v496, %v492
        %v597 = vpack.c.b16 %v497, %v493
        %v598 = vpack.c.b16 %v498, %v494
        %v599 = vpack.c.b16 %v499, %v495
        %v600 = vpack.c.b16 %v504, %v500
        %v601 = vpack.c.b16 %v505, %v501
        %v602 = vpack.c.b16 %v506, %v502
        %v603 = vpack.c.b16 %v507, %v503
        %v604 = vpack.c.b16 %v512, %v508
        %v605 = vpack.c.b16 %v513, %v509
        %v606 = vpack.c.b16 %v514, %v510
        %v607 = vpack.c.b16 %v515, %v511
        %v608 = vpack.c.b16 %v520, %v516
        %v609 = vpack.c.b16 %v521, %v517
        %v610 = vpack.c.b16 %v522, %v518
        %v611 = vpack.c.b16 %v523, %v519
        %v612 = vpack.c.b16 %v528, %v524
        %v613 = vpack.c.b16 %v529, %v525
        %v614 = vpack.c.b16 %v530, %v526
        %v615 = vpack.c.b16 %v531, %v527
        %v616 = vpack.c.b16 %v536, %v532
        %v617 = vpack.c.b16 %v537, %v533
        %v618 = vpack.c.b16 %v538, %v534
        %v619 = vpack.c.b16 %v539, %v535
        %v620 = vpack.c.b16 %v544, %v540
        %v621 = vpack.c.b16 %v545, %v541
        %v622 = vpack.c.b16 %v546, %v542
        %v623 = vpack.c.b16 %v547, %v543
        %v624 = vpack.c.b16 %v552, %v548
        %v625 = vpack.c.b16 %v553, %v549
        %v626 = vpack.c.b16 %v554, %v550
        %v627 = vpack.c.b16 %v555, %v551
        %v628 = vpack.c.b16 %v560, %v556
        %v629 = vpack.c.b16 %v561, %v557
        %v630 = vpack.c.b16 %v562, %v558
        %v631 = vpack.c.b16 %v563, %v559
        %v632 = vpack.c.b16 %v568, %v564
        %v633 = vpack.c.b16 %v569, %v565
        %v634 = vpack.c.b16 %v570, %v566
        %v635 = vpack.c.b16 %v571, %v567
        %700 = vmatprep.subr.bf16.mxu0 %v601
        %701 = vmatpush1.bf16.msra.mxu0 %v600
        %702 = vmatprep.subr.bf16.mxu0 %v597
        %703 = vmatpush1.bf16.msra.mxu0 %v596
        %704 = vmatprep.subr.bf16.mxu0 %v593
        %705 = vmatpush1.bf16.msra.mxu0 %v592
        %706 = vmatprep.subr.bf16.mxu0 %v589
        %707 = vmatpush1.bf16.msra.mxu0 %v588
        %708 = vmatprep.subr.bf16.mxu0 %v585
        %709 = vmatpush1.bf16.msra.mxu0 %v584
        %710 = vmatprep.subr.bf16.mxu0 %v581
        %711 = vmatpush1.bf16.msra.mxu0 %v580
        %712 = vmatprep.subr.bf16.mxu0 %v577
        %713 = vmatpush1.bf16.msra.mxu0 %v576
        %714 = vmatprep.subr.bf16.mxu0 %v573
        %715 = vmatpush1.bf16.msra.mxu0 %v572
        %716 = vmatprep.subr.bf16.mxu0 %v633
        %717 = vmatpush2.bf16.msra.mxu0 %v632
        %718 = vmatprep.subr.bf16.mxu0 %v629
        %719 = vmatpush2.bf16.msra.mxu0 %v628
        %720 = vmatprep.subr.bf16.mxu0 %v625
        %721 = vmatpush2.bf16.msra.mxu0 %v624
        %722 = vmatprep.subr.bf16.mxu0 %v621
        %723 = vmatpush2.bf16.msra.mxu0 %v620
        %724 = vmatprep.subr.bf16.mxu0 %v617
        %725 = vmatpush2.bf16.msra.mxu0 %v616
        %726 = vmatprep.subr.bf16.mxu0 %v613
        %727 = vmatpush2.bf16.msra.mxu0 %v612
        %728 = vmatprep.subr.bf16.mxu0 %v609
        %729 = vmatpush2.bf16.msra.mxu0 %v608
        %730 = vmatprep.subr.bf16.mxu0 %v605
        %731 = vmatpush2.bf16.msra.mxu0 %v604
        %732 = vmatprep.mubr.bf16.mxu0 %v293
        %733 = vmatmul.mubr.bf16.gmra.mxu0 %v292
        %v734 = vpop.f32.mrf.mxu0
        %v735 = vadd.f32 %v363, %v734
        %v736 = vpop.f32.mrf.mxu0
        %v737 = vadd.f32 %v367, %v736
        %v738 = vpop.f32.mrf.mxu0
        %v739 = vadd.f32 %v363, %v738
        %v740 = vpop.f32.mrf.mxu0
        %v741 = vadd.f32 %v367, %v740
        %742 = vdwg.mxu0
        %743 = vmatprep.subr.bf16.mxu0 %v603
        %744 = vmatpush1.bf16.msra.mxu0 %v602
        %745 = vmatprep.subr.bf16.mxu0 %v599
        %746 = vmatpush1.bf16.msra.mxu0 %v598
        %747 = vmatprep.subr.bf16.mxu0 %v595
        %748 = vmatpush1.bf16.msra.mxu0 %v594
        %749 = vmatprep.subr.bf16.mxu0 %v591
        %750 = vmatpush1.bf16.msra.mxu0 %v590
        %751 = vmatprep.subr.bf16.mxu0 %v587
        %752 = vmatpush1.bf16.msra.mxu0 %v586
        %753 = vmatprep.subr.bf16.mxu0 %v583
        %754 = vmatpush1.bf16.msra.mxu0 %v582
        %755 = vmatprep.subr.bf16.mxu0 %v579
        %756 = vmatpush1.bf16.msra.mxu0 %v578
        %757 = vmatprep.subr.bf16.mxu0 %v575
        %758 = vmatpush1.bf16.msra.mxu0 %v574
        %759 = vmatprep.subr.bf16.mxu0 %v635
        %760 = vmatpush2.bf16.msra.mxu0 %v634
        %761 = vmatprep.subr.bf16.mxu0 %v631
        %762 = vmatpush2.bf16.msra.mxu0 %v630
        %763 = vmatprep.subr.bf16.mxu0 %v627
        %764 = vmatpush2.bf16.msra.mxu0 %v626
        %765 = vmatprep.subr.bf16.mxu0 %v623
        %766 = vmatpush2.bf16.msra.mxu0 %v622
        %767 = vmatprep.subr.bf16.mxu0 %v619
        %768 = vmatpush2.bf16.msra.mxu0 %v618
        %769 = vmatprep.subr.bf16.mxu0 %v615
        %770 = vmatpush2.bf16.msra.mxu0 %v614
        %771 = vmatprep.subr.bf16.mxu0 %v611
        %772 = vmatpush2.bf16.msra.mxu0 %v610
        %773 = vmatprep.subr.bf16.mxu0 %v607
        %774 = vmatpush2.bf16.msra.mxu0 %v606
        %775 = vmatprep.mubr.bf16.mxu0 %v293
        %776 = vmatmul.mubr.bf16.gmra.mxu0 %v292
        %v777 = vpop.f32.mrf.mxu0
        %v778 = vadd.f32 %v371, %v777
        %v779 = vpop.f32.mrf.mxu0
        %v780 = vadd.f32 %v375, %v779
        %v781 = vpop.f32.mrf.mxu0
        %v782 = vadd.f32 %v371, %v781
        %v783 = vpop.f32.mrf.mxu0
        %v784 = vadd.f32 %v375, %v783
        %785 = vdwg.mxu0
        %v786 = vmax.f32 %v735, 0.0
        %v787 = vmax.f32 %v737, 0.0
        %v788 = vmax.f32 %v778, 0.0
        %v789 = vmax.f32 %v780, 0.0
        %v790 = vmax.f32 %v739, 0.0
        %v791 = vmax.f32 %v741, 0.0
        %v792 = vmax.f32 %v782, 0.0
        %v793 = vmax.f32 %v784, 0.0
        %v794 = vpack.c.bf16 %v790, %v786
        %v795 = vpack.c.bf16 %v791, %v787
        %v796 = vpack.c.bf16 %v792, %v788
        %v797 = vpack.c.bf16 %v793, %v789
        %v798 = vld [vmem:[#allocation8] sm:$0xff]
        %v799 = vld [vmem:[#allocation8 + $0x8] sm:$0xff]
        %v800 = vld [vmem:[#allocation8 + $0x10] sm:$0xff]
        %v801 = vld [vmem:[#allocation8 + $0x18] sm:$0xff]
        %v802 = vld [vmem:[#allocation8 + $0x20] sm:$0xff]
        %v803 = vld [vmem:[#allocation8 + $0x28] sm:$0xff]
        %v804 = vld [vmem:[#allocation8 + $0x30] sm:$0xff]
        %v805 = vld [vmem:[#allocation8 + $0x38] sm:$0xff]
        %v806 = vld [vmem:[#allocation8 + $0x40] sm:$0xff]
        %v807 = vld [vmem:[#allocation8 + $0x48] sm:$0xff]
        %v808 = vld [vmem:[#allocation8 + $0x50] sm:$0xff]
        %v809 = vld [vmem:[#allocation8 + $0x58] sm:$0xff]
        %v810 = vld [vmem:[#allocation8 + $0x60] sm:$0xff]
        %v811 = vld [vmem:[#allocation8 + $0x68] sm:$0xff]
        %v812 = vld [vmem:[#allocation8 + $0x70] sm:$0xff]
        %v813 = vld [vmem:[#allocation8 + $0x78] sm:$0xff]
        %v814 = vld [vmem:[#allocation8 + $0x80] sm:$0xff]
        %v815 = vld [vmem:[#allocation8 + $0x88] sm:$0xff]
        %v816 = vld [vmem:[#allocation8 + $0x90] sm:$0xff]
        %v817 = vld [vmem:[#allocation8 + $0x98] sm:$0xff]
        %v818 = vld [vmem:[#allocation8 + $0xa0] sm:$0xff]
        %v819 = vld [vmem:[#allocation8 + $0xa8] sm:$0xff]
        %v820 = vld [vmem:[#allocation8 + $0xb0] sm:$0xff]
        %v821 = vld [vmem:[#allocation8 + $0xb8] sm:$0xff]
        %v822 = vld [vmem:[#allocation8 + $0xc0] sm:$0xff]
        %v823 = vld [vmem:[#allocation8 + $0xc8] sm:$0xff]
        %v824 = vld [vmem:[#allocation8 + $0xd0] sm:$0xff]
        %v825 = vld [vmem:[#allocation8 + $0xd8] sm:$0xff]
        %v826 = vld [vmem:[#allocation8 + $0xe0] sm:$0xff]
        %v827 = vld [vmem:[#allocation8 + $0xe8] sm:$0xff]
        %v828 = vld [vmem:[#allocation8 + $0xf0] sm:$0xff]
        %v829 = vld [vmem:[#allocation8 + $0xf8] sm:$0xff]
        %v830 = vld [vmem:[#allocation8 + $0x100] sm:$0xff]
        %v831 = vld [vmem:[#allocation8 + $0x108] sm:$0xff]
        %v832 = vld [vmem:[#allocation8 + $0x110] sm:$0xff]
        %v833 = vld [vmem:[#allocation8 + $0x118] sm:$0xff]
        %v834 = vld [vmem:[#allocation8 + $0x120] sm:$0xff]
        %v835 = vld [vmem:[#allocation8 + $0x128] sm:$0xff]
        %v836 = vld [vmem:[#allocation8 + $0x130] sm:$0xff]
        %v837 = vld [vmem:[#allocation8 + $0x138] sm:$0xff]
        %v838 = vld [vmem:[#allocation8 + $0x140] sm:$0xff]
        %v839 = vld [vmem:[#allocation8 + $0x148] sm:$0xff]
        %v840 = vld [vmem:[#allocation8 + $0x150] sm:$0xff]
        %v841 = vld [vmem:[#allocation8 + $0x158] sm:$0xff]
        %v842 = vld [vmem:[#allocation8 + $0x160] sm:$0xff]
        %v843 = vld [vmem:[#allocation8 + $0x168] sm:$0xff]
        %v844 = vld [vmem:[#allocation8 + $0x170] sm:$0xff]
        %v845 = vld [vmem:[#allocation8 + $0x178] sm:$0xff]
        %v846 = vld [vmem:[#allocation8 + $0x180] sm:$0xff]
        %v847 = vld [vmem:[#allocation8 + $0x188] sm:$0xff]
        %v848 = vld [vmem:[#allocation8 + $0x190] sm:$0xff]
        %v849 = vld [vmem:[#allocation8 + $0x198] sm:$0xff]
        %v850 = vld [vmem:[#allocation8 + $0x1a0] sm:$0xff]
        %v851 = vld [vmem:[#allocation8 + $0x1a8] sm:$0xff]
        %v852 = vld [vmem:[#allocation8 + $0x1b0] sm:$0xff]
        %v853 = vld [vmem:[#allocation8 + $0x1b8] sm:$0xff]
        %v854 = vld [vmem:[#allocation8 + $0x1c0] sm:$0xff]
        %v855 = vld [vmem:[#allocation8 + $0x1c8] sm:$0xff]
        %v856 = vld [vmem:[#allocation8 + $0x1d0] sm:$0xff]
        %v857 = vld [vmem:[#allocation8 + $0x1d8] sm:$0xff]
        %v858 = vld [vmem:[#allocation8 + $0x1e0] sm:$0xff]
        %v859 = vld [vmem:[#allocation8 + $0x1e8] sm:$0xff]
        %v860 = vld [vmem:[#allocation8 + $0x1f0] sm:$0xff]
        %v861 = vld [vmem:[#allocation8 + $0x1f8] sm:$0xff]
        %v862 = vld [vmem:[%s4] sm:$0x3]
        %v864 = vlaneseq
        %v865 = vshrl.u32 %v864, 7
        %v866 = vsub.s32 0, %v865
        %v867 = vrot.slane %v862, %v866
        %v868 = vlaneseq
        %v869 = vshrl.u32 %v868, 7
        %v870 = vsub.s32 1, %v869
        %v871 = vrot.slane %v862, %v870
        %v938 = vunpack.c.l.b16 %v798
        %v939 = vunpack.c.h.b16 %v798
        %v940 = vunpack.c.l.b16 %v799
        %v941 = vunpack.c.h.b16 %v799
        %v942 = vunpack.c.l.b16 %v800
        %v943 = vunpack.c.h.b16 %v800
        %v944 = vunpack.c.l.b16 %v801
        %v945 = vunpack.c.h.b16 %v801
        %v946 = vunpack.c.l.b16 %v802
        %v947 = vunpack.c.h.b16 %v802
        %v948 = vunpack.c.l.b16 %v803
        %v949 = vunpack.c.h.b16 %v803
        %v950 = vunpack.c.l.b16 %v804
        %v951 = vunpack.c.h.b16 %v804
        %v952 = vunpack.c.l.b16 %v805
        %v953 = vunpack.c.h.b16 %v805
        %v954 = vunpack.c.l.b16 %v806
        %v955 = vunpack.c.h.b16 %v806
        %v956 = vunpack.c.l.b16 %v807
        %v957 = vunpack.c.h.b16 %v807
        %v958 = vunpack.c.l.b16 %v808
        %v959 = vunpack.c.h.b16 %v808
        %v960 = vunpack.c.l.b16 %v809
        %v961 = vunpack.c.h.b16 %v809
        %v962 = vunpack.c.l.b16 %v810
        %v963 = vunpack.c.h.b16 %v810
        %v964 = vunpack.c.l.b16 %v811
        %v965 = vunpack.c.h.b16 %v811
        %v966 = vunpack.c.l.b16 %v812
        %v967 = vunpack.c.h.b16 %v812
        %v968 = vunpack.c.l.b16 %v813
        %v969 = vunpack.c.h.b16 %v813
        %v970 = vunpack.c.l.b16 %v814
        %v971 = vunpack.c.h.b16 %v814
        %v972 = vunpack.c.l.b16 %v815
        %v973 = vunpack.c.h.b16 %v815
        %v974 = vunpack.c.l.b16 %v816
        %v975 = vunpack.c.h.b16 %v816
        %v976 = vunpack.c.l.b16 %v817
        %v977 = vunpack.c.h.b16 %v817
        %v978 = vunpack.c.l.b16 %v818
        %v979 = vunpack.c.h.b16 %v818
        %v980 = vunpack.c.l.b16 %v819
        %v981 = vunpack.c.h.b16 %v819
        %v982 = vunpack.c.l.b16 %v820
        %v983 = vunpack.c.h.b16 %v820
        %v984 = vunpack.c.l.b16 %v821
        %v985 = vunpack.c.h.b16 %v821
        %v986 = vunpack.c.l.b16 %v822
        %v987 = vunpack.c.h.b16 %v822
        %v988 = vunpack.c.l.b16 %v823
        %v989 = vunpack.c.h.b16 %v823
        %v990 = vunpack.c.l.b16 %v824
        %v991 = vunpack.c.h.b16 %v824
        %v992 = vunpack.c.l.b16 %v825
        %v993 = vunpack.c.h.b16 %v825
        %v994 = vunpack.c.l.b16 %v826
        %v995 = vunpack.c.h.b16 %v826
        %v996 = vunpack.c.l.b16 %v827
        %v997 = vunpack.c.h.b16 %v827
        %v998 = vunpack.c.l.b16 %v828
        %v999 = vunpack.c.h.b16 %v828
        %v1000 = vunpack.c.l.b16 %v829
        %v1001 = vunpack.c.h.b16 %v829
        %v1002 = vunpack.c.l.b16 %v830
        %v1003 = vunpack.c.h.b16 %v830
        %v1004 = vunpack.c.l.b16 %v831
        %v1005 = vunpack.c.h.b16 %v831
        %v1006 = vunpack.c.l.b16 %v832
        %v1007 = vunpack.c.h.b16 %v832
        %v1008 = vunpack.c.l.b16 %v833
        %v1009 = vunpack.c.h.b16 %v833
        %v1010 = vunpack.c.l.b16 %v834
        %v1011 = vunpack.c.h.b16 %v834
        %v1012 = vunpack.c.l.b16 %v835
        %v1013 = vunpack.c.h.b16 %v835
        %v1014 = vunpack.c.l.b16 %v836
        %v1015 = vunpack.c.h.b16 %v836
        %v1016 = vunpack.c.l.b16 %v837
        %v1017 = vunpack.c.h.b16 %v837
        %v1018 = vunpack.c.l.b16 %v838
        %v1019 = vunpack.c.h.b16 %v838
        %v1020 = vunpack.c.l.b16 %v839
        %v1021 = vunpack.c.h.b16 %v839
        %v1022 = vunpack.c.l.b16 %v840
        %v1023 = vunpack.c.h.b16 %v840
        %v1024 = vunpack.c.l.b16 %v841
        %v1025 = vunpack.c.h.b16 %v841
        %v1026 = vunpack.c.l.b16 %v842
        %v1027 = vunpack.c.h.b16 %v842
        %v1028 = vunpack.c.l.b16 %v843
        %v1029 = vunpack.c.h.b16 %v843
        %v1030 = vunpack.c.l.b16 %v844
        %v1031 = vunpack.c.h.b16 %v844
        %v1032 = vunpack.c.l.b16 %v845
        %v1033 = vunpack.c.h.b16 %v845
        %v1034 = vunpack.c.l.b16 %v846
        %v1035 = vunpack.c.h.b16 %v846
        %v1036 = vunpack.c.l.b16 %v847
        %v1037 = vunpack.c.h.b16 %v847
        %v1038 = vunpack.c.l.b16 %v848
        %v1039 = vunpack.c.h.b16 %v848
        %v1040 = vunpack.c.l.b16 %v849
        %v1041 = vunpack.c.h.b16 %v849
        %v1042 = vunpack.c.l.b16 %v850
        %v1043 = vunpack.c.h.b16 %v850
        %v1044 = vunpack.c.l.b16 %v851
        %v1045 = vunpack.c.h.b16 %v851
        %v1046 = vunpack.c.l.b16 %v852
        %v1047 = vunpack.c.h.b16 %v852
        %v1048 = vunpack.c.l.b16 %v853
        %v1049 = vunpack.c.h.b16 %v853
        %v1050 = vunpack.c.l.b16 %v854
        %v1051 = vunpack.c.h.b16 %v854
        %v1052 = vunpack.c.l.b16 %v855
        %v1053 = vunpack.c.h.b16 %v855
        %v1054 = vunpack.c.l.b16 %v856
        %v1055 = vunpack.c.h.b16 %v856
        %v1056 = vunpack.c.l.b16 %v857
        %v1057 = vunpack.c.h.b16 %v857
        %v1058 = vunpack.c.l.b16 %v858
        %v1059 = vunpack.c.h.b16 %v858
        %v1060 = vunpack.c.l.b16 %v859
        %v1061 = vunpack.c.h.b16 %v859
        %v1062 = vunpack.c.l.b16 %v860
        %v1063 = vunpack.c.h.b16 %v860
        %v1064 = vunpack.c.l.b16 %v861
        %v1065 = vunpack.c.h.b16 %v861
        %v1066 = vpack.c.b16 %v940, %v938
        %v1067 = vpack.c.b16 %v941, %v939
        %v1068 = vpack.c.b16 %v944, %v942
        %v1069 = vpack.c.b16 %v945, %v943
        %v1070 = vpack.c.b16 %v948, %v946
        %v1071 = vpack.c.b16 %v949, %v947
        %v1072 = vpack.c.b16 %v952, %v950
        %v1073 = vpack.c.b16 %v953, %v951
        %v1074 = vpack.c.b16 %v956, %v954
        %v1075 = vpack.c.b16 %v957, %v955
        %v1076 = vpack.c.b16 %v960, %v958
        %v1077 = vpack.c.b16 %v961, %v959
        %v1078 = vpack.c.b16 %v964, %v962
        %v1079 = vpack.c.b16 %v965, %v963
        %v1080 = vpack.c.b16 %v968, %v966
        %v1081 = vpack.c.b16 %v969, %v967
        %v1082 = vpack.c.b16 %v972, %v970
        %v1083 = vpack.c.b16 %v973, %v971
        %v1084 = vpack.c.b16 %v976, %v974
        %v1085 = vpack.c.b16 %v977, %v975
        %v1086 = vpack.c.b16 %v980, %v978
        %v1087 = vpack.c.b16 %v981, %v979
        %v1088 = vpack.c.b16 %v984, %v982
        %v1089 = vpack.c.b16 %v985, %v983
        %v1090 = vpack.c.b16 %v988, %v986
        %v1091 = vpack.c.b16 %v989, %v987
        %v1092 = vpack.c.b16 %v992, %v990
        %v1093 = vpack.c.b16 %v993, %v991
        %v1094 = vpack.c.b16 %v996, %v994
        %v1095 = vpack.c.b16 %v997, %v995
        %v1096 = vpack.c.b16 %v1000, %v998
        %v1097 = vpack.c.b16 %v1001, %v999
        %v1098 = vpack.c.b16 %v1004, %v1002
        %v1099 = vpack.c.b16 %v1005, %v1003
        %v1100 = vpack.c.b16 %v1008, %v1006
        %v1101 = vpack.c.b16 %v1009, %v1007
        %v1102 = vpack.c.b16 %v1012, %v1010
        %v1103 = vpack.c.b16 %v1013, %v1011
        %v1104 = vpack.c.b16 %v1016, %v1014
        %v1105 = vpack.c.b16 %v1017, %v1015
        %v1106 = vpack.c.b16 %v1020, %v1018
        %v1107 = vpack.c.b16 %v1021, %v1019
        %v1108 = vpack.c.b16 %v1024, %v1022
        %v1109 = vpack.c.b16 %v1025, %v1023
        %v1110 = vpack.c.b16 %v1028, %v1026
        %v1111 = vpack.c.b16 %v1029, %v1027
        %v1112 = vpack.c.b16 %v1032, %v1030
        %v1113 = vpack.c.b16 %v1033, %v1031
        %v1114 = vpack.c.b16 %v1036, %v1034
        %v1115 = vpack.c.b16 %v1037, %v1035
        %v1116 = vpack.c.b16 %v1040, %v1038
        %v1117 = vpack.c.b16 %v1041, %v1039
        %v1118 = vpack.c.b16 %v1044, %v1042
        %v1119 = vpack.c.b16 %v1045, %v1043
        %v1120 = vpack.c.b16 %v1048, %v1046
        %v1121 = vpack.c.b16 %v1049, %v1047
        %v1122 = vpack.c.b16 %v1052, %v1050
        %v1123 = vpack.c.b16 %v1053, %v1051
        %v1124 = vpack.c.b16 %v1056, %v1054
        %v1125 = vpack.c.b16 %v1057, %v1055
        %v1126 = vpack.c.b16 %v1060, %v1058
        %v1127 = vpack.c.b16 %v1061, %v1059
        %v1128 = vpack.c.b16 %v1064, %v1062
        %v1129 = vpack.c.b16 %v1065, %v1063
        %1194 = vmatprep.subr.bf16.mxu0 %v1081
        %1195 = vmatpush1.bf16.msra.mxu0 %v1080
        %1196 = vmatprep.subr.bf16.mxu0 %v1079
        %1197 = vmatpush1.bf16.msra.mxu0 %v1078
        %1198 = vmatprep.subr.bf16.mxu0 %v1077
        %1199 = vmatpush1.bf16.msra.mxu0 %v1076
        %1200 = vmatprep.subr.bf16.mxu0 %v1075
        %1201 = vmatpush1.bf16.msra.mxu0 %v1074
        %1202 = vmatprep.subr.bf16.mxu0 %v1073
        %1203 = vmatpush1.bf16.msra.mxu0 %v1072
        %1204 = vmatprep.subr.bf16.mxu0 %v1071
        %1205 = vmatpush1.bf16.msra.mxu0 %v1070
        %1206 = vmatprep.subr.bf16.mxu0 %v1069
        %1207 = vmatpush1.bf16.msra.mxu0 %v1068
        %1208 = vmatprep.subr.bf16.mxu0 %v1067
        %1209 = vmatpush1.bf16.msra.mxu0 %v1066
        %1210 = vmatprep.subr.bf16.mxu0 %v1097
        %1211 = vmatpush2.bf16.msra.mxu0 %v1096
        %1212 = vmatprep.subr.bf16.mxu0 %v1095
        %1213 = vmatpush2.bf16.msra.mxu0 %v1094
        %1214 = vmatprep.subr.bf16.mxu0 %v1093
        %1215 = vmatpush2.bf16.msra.mxu0 %v1092
        %1216 = vmatprep.subr.bf16.mxu0 %v1091
        %1217 = vmatpush2.bf16.msra.mxu0 %v1090
        %1218 = vmatprep.subr.bf16.mxu0 %v1089
        %1219 = vmatpush2.bf16.msra.mxu0 %v1088
        %1220 = vmatprep.subr.bf16.mxu0 %v1087
        %1221 = vmatpush2.bf16.msra.mxu0 %v1086
        %1222 = vmatprep.subr.bf16.mxu0 %v1085
        %1223 = vmatpush2.bf16.msra.mxu0 %v1084
        %1224 = vmatprep.subr.bf16.mxu0 %v1083
        %1225 = vmatpush2.bf16.msra.mxu0 %v1082
        %1226 = vmatprep.mubr.bf16.mxu0 %v795
        %1227 = vmatmul.mubr.bf16.gmra.mxu0 %v794
        %v1228 = vpop.f32.mrf.mxu0
        %v1229 = vadd.f32 %v867, %v1228
        %v1230 = vpop.f32.mrf.mxu0
        %v1231 = vadd.f32 %v871, %v1230
        %v1232 = vpop.f32.mrf.mxu0
        %v1233 = vadd.f32 %v867, %v1232
        %v1234 = vpop.f32.mrf.mxu0
        %v1235 = vadd.f32 %v871, %v1234
        %1236 = vdwg.mxu0
        %1237 = vmatprep.subr.bf16.mxu0 %v1113
        %1238 = vmatpush1.bf16.msra.mxu0 %v1112
        %1239 = vmatprep.subr.bf16.mxu0 %v1111
        %1240 = vmatpush1.bf16.msra.mxu0 %v1110
        %1241 = vmatprep.subr.bf16.mxu0 %v1109
        %1242 = vmatpush1.bf16.msra.mxu0 %v1108
        %1243 = vmatprep.subr.bf16.mxu0 %v1107
        %1244 = vmatpush1.bf16.msra.mxu0 %v1106
        %1245 = vmatprep.subr.bf16.mxu0 %v1105
        %1246 = vmatpush1.bf16.msra.mxu0 %v1104
        %1247 = vmatprep.subr.bf16.mxu0 %v1103
        %1248 = vmatpush1.bf16.msra.mxu0 %v1102
        %1249 = vmatprep.subr.bf16.mxu0 %v1101
        %1250 = vmatpush1.bf16.msra.mxu0 %v1100
        %1251 = vmatprep.subr.bf16.mxu0 %v1099
        %1252 = vmatpush1.bf16.msra.mxu0 %v1098
        %1253 = vmatprep.subr.bf16.mxu0 %v1129
        %1254 = vmatpush2.bf16.msra.mxu0 %v1128
        %1255 = vmatprep.subr.bf16.mxu0 %v1127
        %1256 = vmatpush2.bf16.msra.mxu0 %v1126
        %1257 = vmatprep.subr.bf16.mxu0 %v1125
        %1258 = vmatpush2.bf16.msra.mxu0 %v1124
        %1259 = vmatprep.subr.bf16.mxu0 %v1123
        %1260 = vmatpush2.bf16.msra.mxu0 %v1122
        %1261 = vmatprep.subr.bf16.mxu0 %v1121
        %1262 = vmatpush2.bf16.msra.mxu0 %v1120
        %1263 = vmatprep.subr.bf16.mxu0 %v1119
        %1264 = vmatpush2.bf16.msra.mxu0 %v1118
        %1265 = vmatprep.subr.bf16.mxu0 %v1117
        %1266 = vmatpush2.bf16.msra.mxu0 %v1116
        %1267 = vmatprep.subr.bf16.mxu0 %v1115
        %1268 = vmatpush2.bf16.msra.mxu0 %v1114
        %1269 = vmatprep.mubr.bf16.mxu0 %v797
        %1270 = vmatmul.mubr.bf16.gmra.mxu0 %v796
        %v1271 = vpop.f32.mrf.mxu0
        %v1272 = vadd.f32 %v1229, %v1271
        %v1273 = vpop.f32.mrf.mxu0
        %v1274 = vadd.f32 %v1231, %v1273
        %v1275 = vpop.f32.mrf.mxu0
        %v1276 = vadd.f32 %v1233, %v1275
        %v1277 = vpop.f32.mrf.mxu0
        %v1278 = vadd.f32 %v1235, %v1277
        %1279 = vdwg.mxu0
        %v1280 = vmax.f32 %v1272, 0.0
        %v1281 = vmax.f32 %v1274, 0.0
        %v1282 = vmax.f32 %v1276, 0.0
        %v1283 = vmax.f32 %v1278, 0.0
        %v1284 = vpack.c.bf16 %v1282, %v1280
        %v1285 = vpack.c.bf16 %v1283, %v1281
        %v1288 = vunpack.c.l.b16 %v1284
        %v1289 = vunpack.c.l.b16 %v1285
        %v1290 = vunpack.c.h.b16 %v1284
        %v1291 = vunpack.c.h.b16 %v1285
        %v1292 = vpack.c.b16 %v1289, %v1288
        %v1293 = vpack.c.b16 %v1291, %v1290
        %1296 = vst [vmem:[%s285] sm:$0xff] %v1292
        %1297 = vst [vmem:[%s285 + $0x8] sm:$0xff] %v1293
        %s1298 = sand.u32 %s142, 1
        %s1299 = scalar_lea.sflag [#allocation4], %s1298
        %s1300 = sand.u32 %s142, 1
        %s1301 = smul.addr %s1300, 16
        %s1302 = scalar_lea.vmem [#allocation10], %s1301
        // Predicated region
        $region57: #{tpu_custom_call.1} parent=39 // pred_check
          %p1303 = pneg %p152
        $region58: #{tpu_custom_call.1} parent=39 // pred_check_branch
          %1305 = sbr.rel (%p1303) target = $region60
        $region59: #{tpu_custom_call.1} parent=39 // pred_region
          %s1306 = smul.u32 2, %s24
          %s1308 = ssub.s32 256, 256
          %1309 = vsyncadd %s1299, %s1308
          %s1310 = smul.addr %s1306, 2
          %s1311 = smul.addr %s1310, 64
          %s1312 = scalar_lea.hbm %s5, %s1311
          %s1313 = sshll.u32 %s1302, 4
          %s1314 = int_to_ptr.vmem [resolvable:$true] %s1313
          %1319 = dma.vmem_to_hbm [thread:$0]  %s1314, 256, %s1312, %s1299, 128, 128, 8
        $region60: #{tpu_custom_call.1} parent=39 // pred_fallthru
          _
      $region40: #{tpu_custom_call.1} parent=5 // pred_fallthru
        _
      %p1320 = scmp.le.s32.totalorder 2, %s19
      // Predicated region
      $region61: #{tpu_custom_call.1} parent=5 // pred_check
        %p1321 = pneg %p1320
      $region62: #{tpu_custom_call.1} parent=5 // pred_check_branch
        %1323 = sbr.rel (%p1321) target = $region64
      $region63: #{tpu_custom_call.1} parent=5 // pred_region
        %s1324 = ssub.s32 %s19, 2
        // Predicated region
        $region65: #{tpu_custom_call.1} parent=63 // pred_check
          %p1325 = pneg %p158
        $region66: #{tpu_custom_call.1} parent=63 // pred_check_branch
          %1327 = sbr.rel (%p1325) target = $region68
        $region67: #{tpu_custom_call.1} parent=63 // pred_region
          %s1328 = sand.u32 %s143, 1
          %s1329 = scalar_lea.sflag [#allocation4], %s1328
          %s1330 = sand.u32 %s143, 1
          %s1331 = smul.addr %s1330, 16
          %s1332 = scalar_lea.vmem [#allocation10], %s1331
          %1333 = dma.done %s1329, 256
        $region68: #{tpu_custom_call.1} parent=63 // pred_fallthru
          _
      $region64: #{tpu_custom_call.1} parent=5 // pred_fallthru
        _
    $region6: #{tpu_custom_call.1} parent=1 // loop_footer
      %s23 = sadd.s32 1, %s19
    $region7: #{tpu_custom_call.1} parent=1 // loop_footer_branch
      %18 = sbr.rel target = $region3
    $region8: #{tpu_custom_call.1} parent=1 // loop_exit
      _
    %1334 = vsyncpa [#allocation3], 1
    %s1335 = scalar_lea.sflag [#allocation3], 1
    %1336 = vsyncpa %s1335, 1
    %1337 = vsyncpa [#allocation6], 1
    %1338 = vsyncpa [#allocation9], 1
    %1339 = vsyncpa [#allocation4], 1
    %s1340 = scalar_lea.sflag [#allocation4], 1
    %1341 = vsyncpa %s1340, 1

</llo_original>
